<compile_context>
chip_gen: v5e
topology: v5e:2x2
jax: 0.10.0
libtpu: 0.0.40
codegen_flags: <defaults>
</compile_context>

<pallas_src>
import functools

import jax
import jax.numpy as jnp
from jax.experimental import pallas as pl
from jax.experimental.pallas import tpu as pltpu

EPS = 1e-5
VMEM_LIMIT_BYTES = 48 * 1024 * 1024   # ample headroom under v7x's 64 MiB physical VMEM
L_TILE_MAX = 2048                     # lane-axis tile cap (multiple of 128)


def _round_up(x, m):
    return (x + m - 1) // m * m


# ---------------------------------------------------------------------------
# Pass 1 (stats only): y = W @ x_tile on the MXU; accumulate per-position partial
# sum / sum-of-squares elementwise in VMEM scratch; finalize BN (scale, shift)
# once on the last grid step.  y never touches HBM.
# ---------------------------------------------------------------------------
def stats_kernel(x_ref, w_ref, gamma_ref, beta_ref, ss_ref, sum_ref, sumsq_ref, *, inv_n):
    n_i = pl.program_id(0)
    l_i = pl.program_id(1)

    @pl.when(jnp.logical_and(n_i == 0, l_i == 0))
    def _():
        sum_ref[...] = jnp.zeros_like(sum_ref)
        sumsq_ref[...] = jnp.zeros_like(sumsq_ref)

    # Conv1d(kernel_size=1): (C_out, C_in) @ (C_in, L_tile).  Bias omitted (cancelled by BN).
    y = jnp.dot(w_ref[...], x_ref[0], preferred_element_type=jnp.float32)

    # Elementwise accumulation (VALU only); the cross-lane reduce happens once, below.
    sum_ref[...] += y
    sumsq_ref[...] += y * y

    last = jnp.logical_and(n_i == pl.num_programs(0) - 1, l_i == pl.num_programs(1) - 1)

    @pl.when(last)
    def _():
        s = jnp.sum(sum_ref[...], axis=1, keepdims=True)       # (C_out, 1)
        sq = jnp.sum(sumsq_ref[...], axis=1, keepdims=True)    # (C_out, 1)
        mean = s * inv_n
        # Single-pass biased variance; clamped >= 0.  Per-position partials in scratch keep
        # the accumulation error small for these magnitudes (see review notes).
        var = jnp.maximum(sq * inv_n - mean * mean, 0.0)
        inv_std = jax.lax.rsqrt(var + EPS)
        scale = gamma_ref[...] * inv_std
        shift = beta_ref[...] - mean * scale
        ss_ref[:, 0:1] = scale
        ss_ref[:, 1:2] = shift


# ---------------------------------------------------------------------------
# Pass 2: recompute the k=1 matmul (MXU is idle; redoing it is free) and apply
# scale/shift.  Output is stored directly in (N, C_out, L) -> no epilogue transpose.
# ---------------------------------------------------------------------------
def apply_kernel(x_ref, w_ref, ss_ref, o_ref):
    y = jnp.dot(w_ref[...], x_ref[0], preferred_element_type=jnp.float32)
    ss = ss_ref[...]
    o_ref[0] = (y * ss[:, 0:1] + ss[:, 1:2]).astype(o_ref.dtype)


# ---------------------------------------------------------------------------
# Wrapper
# ---------------------------------------------------------------------------
def conv_reg_block(x, w, b, gamma, beta):
    """x: (N, C_in, L) f32. w: (C_out, C_in). b/gamma/beta: (C_out,).

    `b` is accepted for API parity with the PyTorch module but unused: a per-channel
    bias is exactly removed by training-mode BatchNorm's mean subtraction.
    """
    del b  # algebraically cancelled by BN (training mode)
    N, C_in, L = x.shape
    C_out = w.shape[0]

    # Lane-axis (L) tiling.  If L fits one tile, use it as-is (no padding, no copy);
    # otherwise split into near-equal 128-multiple tiles to minimize tail padding.
    if L <= L_TILE_MAX:
        l_tile, n_l, L_p = L, 1, L
        x_p = x
    else:
        n_l = pl.cdiv(L, L_TILE_MAX)
        l_tile = _round_up(pl.cdiv(L, n_l), 128)
        L_p = n_l * l_tile
        x_p = jnp.pad(x, ((0, 0), (0, 0), (0, L_p - L))) if L_p != L else x

    gamma2 = gamma.reshape(C_out, 1)
    beta2 = beta.reshape(C_out, 1)
    inv_n = 1.0 / float(N * L)  # zero-padded lanes contribute exactly 0 to sum/sumsq (no bias)

    # ---- pass 1: batch statistics -> BN (scale, shift) ----
    ss = pl.pallas_call(
        functools.partial(stats_kernel, inv_n=inv_n),
        out_shape=jax.ShapeDtypeStruct((C_out, 2), jnp.float32),
        grid_spec=pltpu.PrefetchScalarGridSpec(
            num_scalar_prefetch=0,
            grid=(N, n_l),
            in_specs=[
                pl.BlockSpec((1, C_in, l_tile), lambda n, l: (n, 0, l)),
                pl.BlockSpec((C_out, C_in), lambda n, l: (0, 0)),
                pl.BlockSpec((C_out, 1), lambda n, l: (0, 0)),
                pl.BlockSpec((C_out, 1), lambda n, l: (0, 0)),
            ],
            out_specs=pl.BlockSpec((C_out, 2), lambda n, l: (0, 0)),
            scratch_shapes=[
                pltpu.VMEM((C_out, l_tile), jnp.float32),   # per-position partial sum
                pltpu.VMEM((C_out, l_tile), jnp.float32),   # per-position partial sum of squares
            ],
        ),
        compiler_params=pltpu.CompilerParams(
            dimension_semantics=("arbitrary", "arbitrary"),   # resident accumulator -> serial
            vmem_limit_bytes=VMEM_LIMIT_BYTES,
        ),
    )(x_p, w, gamma2, beta2)

    # ---- pass 2: out = scale * (W @ x) + shift, written directly in NCL layout ----
    out_p = pl.pallas_call(
        apply_kernel,
        out_shape=jax.ShapeDtypeStruct((N, C_out, L_p), x.dtype),
        grid_spec=pltpu.PrefetchScalarGridSpec(
            num_scalar_prefetch=0,
            grid=(N, n_l),
            in_specs=[
                pl.BlockSpec((1, C_in, l_tile), lambda n, l: (n, 0, l)),
                pl.BlockSpec((C_out, C_in), lambda n, l: (0, 0)),
                pl.BlockSpec((C_out, 2), lambda n, l: (0, 0)),
            ],
            out_specs=pl.BlockSpec((1, C_out, l_tile), lambda n, l: (n, 0, l)),
        ),
        compiler_params=pltpu.CompilerParams(
            dimension_semantics=("parallel", "parallel"),
            vmem_limit_bytes=VMEM_LIMIT_BYTES,
        ),
    )(x_p, w, ss)

    return out_p if L_p == L else out_p[:, :, :L]


# ---------------------------------------------------------------------------
# Pure-JAX reference (keeps the conv bias; training-mode BN cancels it, so results match)
# ---------------------------------------------------------------------------
def conv_reg_block_ref(x, w, b, gamma, beta):
    y = jnp.einsum("ncl,oc->nol", x, w, precision="highest") + b[None, :, None]
    mean = jnp.mean(y, axis=(0, 2), keepdims=True)
    var = jnp.mean((y - mean) ** 2, axis=(0, 2), keepdims=True)
    y_hat = (y - mean) / jnp.sqrt(var + EPS)
    return y_hat * gamma[None, :, None] + beta[None, :, None]


if __name__ == "__main__":
    # ConvRegBlock(t_inp=2, t_out=3, n_out=8, n_points=unused, hidden_dim=16)
    t_inp, t_out, n_out, hidden_dim = 2, 3, 8, 16
    C_in = hidden_dim * t_inp      # 32
    C_out = t_out * n_out          # 24
    N, L = 2, 16

    key = jax.random.PRNGKey(0)
    kx, kw, kb, kg, kbe = jax.random.split(key, 5)
    x = jax.random.normal(kx, (N, C_in, L), dtype=jnp.float32)
    # PyTorch Conv1d weight is (C_out, C_in, 1); kernel_size=1 -> squeeze last dim.
    w = jax.random.normal(kw, (C_out, C_in), dtype=jnp.float32) * 0.1
    b = jax.random.normal(kb, (C_out,), dtype=jnp.float32) * 0.1
    # BatchNorm affine params (PyTorch defaults are ones/zeros; randomized to exercise affine).
    gamma = 1.0 + 0.1 * jax.random.normal(kg, (C_out,), dtype=jnp.float32)
    beta = 0.1 * jax.random.normal(kbe, (C_out,), dtype=jnp.float32)

    fn = jax.jit(conv_reg_block)
    out = jax.block_until_ready(fn(x, w, b, gamma, beta))

    ref = conv_reg_block_ref(x, w, b, gamma, beta)
    assert out.shape == (N, C_out, L)
    # Tolerance leaves headroom for MXU pass-decomposition differences between the in-kernel
    # f32 dot and the XLA reference einsum; structural bugs would be O(1) errors.
    assert jnp.allclose(out, ref, atol=5e-3, rtol=5e-3), "mismatch vs reference"

    print("KERNEL_OK")
</pallas_src>

<mosaic_0001>
module attributes {stable_mosaic.version = 11 : i64} {
  func.func @apply_kernel(%arg0: i32, %arg1: i32, %arg2: memref<1x32x16xf32, #tpu.memory_space<vmem>>, %arg3: memref<24x32xf32, #tpu.memory_space<vmem>>, %arg4: memref<24x2xf32, #tpu.memory_space<vmem>>, %arg5: memref<1x24x16xf32, #tpu.memory_space<vmem>>) attributes {dimension_semantics = [#tpu.dimension_semantics<parallel>, #tpu.dimension_semantics<parallel>], iteration_bounds = array<i64: 2, 1>, scalar_prefetch = 0 : i64, scratch_operands = 0 : i64, tpu.core_type = #tpu.core_type<tc>, window_params = [{transform_indices = @transform_0, window_bounds = array<i64: 1, 32, 16>}, {pipeline_mode = #tpu.pipeline_mode<synchronous>, transform_indices = @transform_1, window_bounds = array<i64: 24, 32>}, {pipeline_mode = #tpu.pipeline_mode<synchronous>, transform_indices = @transform_2, window_bounds = array<i64: 24, 2>}, {transform_indices = @transform_3, window_bounds = array<i64: 1, 24, 16>}]} {
    %c0 = arith.constant 0 : index
    %c0_0 = arith.constant 0 : index
    %0 = vector.load %arg3[%c0, %c0_0] : memref<24x32xf32, #tpu.memory_space<vmem>>, vector<24x32xf32>
    %c0_1 = arith.constant 0 : index
    %c0_2 = arith.constant 0 : index
    %c0_3 = arith.constant 0 : index
    %1 = vector.load %arg2[%c0_1, %c0_2, %c0_3] : memref<1x32x16xf32, #tpu.memory_space<vmem>>, vector<1x32x16xf32>
    %2 = vector.shape_cast %1 : vector<1x32x16xf32> to vector<32x16xf32>
    %cst = arith.constant dense<0.000000e+00> : vector<24x16xf32>
    %3 = tpu.matmul %0, %2, %cst {dimension_numbers = #tpu.dot_dimension_numbers<[1], [0], [0], [1], [0, 0, 1, 1], [], []>} : vector<24x32xf32>, vector<32x16xf32>, vector<24x16xf32> -> vector<24x16xf32>
    %c0_4 = arith.constant 0 : index
    %c0_5 = arith.constant 0 : index
    %4 = vector.load %arg4[%c0_4, %c0_5] : memref<24x2xf32, #tpu.memory_space<vmem>>, vector<24x2xf32>
    %5 = vector.extract_strided_slice %4 {offsets = [0, 0], sizes = [24, 1], strides = [1, 1]} : vector<24x2xf32> to vector<24x1xf32>
    %6 = vector.broadcast %5 : vector<24x1xf32> to vector<24x16xf32>
    %7 = arith.mulf %3, %6 : vector<24x16xf32>
    %8 = vector.extract_strided_slice %4 {offsets = [0, 1], sizes = [24, 1], strides = [1, 1]} : vector<24x2xf32> to vector<24x1xf32>
    %9 = vector.broadcast %8 : vector<24x1xf32> to vector<24x16xf32>
    %10 = arith.addf %7, %9 : vector<24x16xf32>
    %c0_6 = arith.constant 0 : index
    %c0_7 = arith.constant 0 : index
    %c0_8 = arith.constant 0 : index
    %11 = vector.load %arg5[%c0_6, %c0_7, %c0_8] : memref<1x24x16xf32, #tpu.memory_space<vmem>>, vector<1x24x16xf32>
    %12 = vector.shape_cast %11 : vector<1x24x16xf32> to vector<24x16xf32>
    %13 = vector.shape_cast %10 : vector<24x16xf32> to vector<1x24x16xf32>
    tpu.vector_store %arg5[%c0_6, %c0_7, %c0_8], %13 {strides = array<i32>} : memref<1x24x16xf32, #tpu.memory_space<vmem>>, vector<1x24x16xf32>,
    return
  }
  func.func @transform_0(%arg0: i32, %arg1: i32) -> (i32, i32, i32) {
    %c0_i32 = arith.constant 0 : i32
    %c0_i32_0 = arith.constant 0 : i32
    return %arg0, %c0_i32, %arg1 : i32, i32, i32
  }
  func.func @transform_1(%arg0: i32, %arg1: i32) -> (i32, i32) {
    %c0_i32 = arith.constant 0 : i32
    %c0_i32_0 = arith.constant 0 : i32
    %c0_i32_1 = arith.constant 0 : i32
    return %c0_i32, %c0_i32_0 : i32, i32
  }
  func.func @transform_2(%arg0: i32, %arg1: i32) -> (i32, i32) {
    %c0_i32 = arith.constant 0 : i32
    %c0_i32_0 = arith.constant 0 : i32
    %c0_i32_1 = arith.constant 0 : i32
    return %c0_i32, %c0_i32_0 : i32, i32
  }
  func.func @transform_3(%arg0: i32, %arg1: i32) -> (i32, i32, i32) {
    %c0_i32 = arith.constant 0 : i32
    %c0_i32_0 = arith.constant 0 : i32
    return %arg0, %c0_i32, %arg1 : i32, i32, i32
  }
}

module attributes {stable_mosaic.version = 11 : i64} {
  func.func @stats_kernel(%arg0: i32, %arg1: i32, %arg2: memref<1x32x16xf32, #tpu.memory_space<vmem>>, %arg3: memref<24x32xf32, #tpu.memory_space<vmem>>, %arg4: memref<24x1xf32, #tpu.memory_space<vmem>>, %arg5: memref<24x1xf32, #tpu.memory_space<vmem>>, %arg6: memref<24x2xf32, #tpu.memory_space<vmem>>, %arg7: memref<24x16xf32, #tpu.memory_space<vmem>>, %arg8: memref<24x16xf32, #tpu.memory_space<vmem>>) attributes {dimension_semantics = [#tpu.dimension_semantics<arbitrary>, #tpu.dimension_semantics<arbitrary>], iteration_bounds = array<i64: 2, 1>, scalar_prefetch = 0 : i64, scratch_operands = 2 : i64, tpu.core_type = #tpu.core_type<tc>, window_params = [{transform_indices = @transform_0, window_bounds = array<i64: 1, 32, 16>}, {pipeline_mode = #tpu.pipeline_mode<synchronous>, transform_indices = @transform_1, window_bounds = array<i64: 24, 32>}, {pipeline_mode = #tpu.pipeline_mode<synchronous>, transform_indices = @transform_2, window_bounds = array<i64: 24, 1>}, {pipeline_mode = #tpu.pipeline_mode<synchronous>, transform_indices = @transform_3, window_bounds = array<i64: 24, 1>}, {pipeline_mode = #tpu.pipeline_mode<synchronous>, transform_indices = @transform_4, window_bounds = array<i64: 24, 2>}]} {
    %c0_i32 = arith.constant 0 : i32
    %0 = arith.cmpi eq, %arg0, %c0_i32 : i32
    %c0_i32_0 = arith.constant 0 : i32
    %1 = arith.cmpi eq, %arg1, %c0_i32_0 : i32
    %2 = arith.andi %0, %1 : i1
    %3 = arith.extui %2 : i1 to i32
    %c0_i32_1 = arith.constant 0 : i32
    %4 = arith.cmpi ne, %3, %c0_i32_1 : i32
    scf.if %4 {
      %cst_16 = arith.constant 0.000000e+00 : f32
      %21 = vector.broadcast %cst_16 : f32 to vector<24x16xf32>
      %c0_17 = arith.constant 0 : index
      %c0_18 = arith.constant 0 : index
      %22 = vector.load %arg7[%c0_17, %c0_18] : memref<24x16xf32, #tpu.memory_space<vmem>>, vector<24x16xf32>
      tpu.vector_store %arg7[%c0_17, %c0_18], %21 {strides = array<i32>} : memref<24x16xf32, #tpu.memory_space<vmem>>, vector<24x16xf32>,
      %cst_19 = arith.constant 0.000000e+00 : f32
      %23 = vector.broadcast %cst_19 : f32 to vector<24x16xf32>
      %c0_20 = arith.constant 0 : index
      %c0_21 = arith.constant 0 : index
      %24 = vector.load %arg8[%c0_20, %c0_21] : memref<24x16xf32, #tpu.memory_space<vmem>>, vector<24x16xf32>
      tpu.vector_store %arg8[%c0_20, %c0_21], %23 {strides = array<i32>} : memref<24x16xf32, #tpu.memory_space<vmem>>, vector<24x16xf32>,
    } else {
    }
    %c0 = arith.constant 0 : index
    %c0_2 = arith.constant 0 : index
    %5 = vector.load %arg3[%c0, %c0_2] : memref<24x32xf32, #tpu.memory_space<vmem>>, vector<24x32xf32>
    %c0_3 = arith.constant 0 : index
    %c0_4 = arith.constant 0 : index
    %c0_5 = arith.constant 0 : index
    %6 = vector.load %arg2[%c0_3, %c0_4, %c0_5] : memref<1x32x16xf32, #tpu.memory_space<vmem>>, vector<1x32x16xf32>
    %7 = vector.shape_cast %6 : vector<1x32x16xf32> to vector<32x16xf32>
    %cst = arith.constant dense<0.000000e+00> : vector<24x16xf32>
    %8 = tpu.matmul %5, %7, %cst {dimension_numbers = #tpu.dot_dimension_numbers<[1], [0], [0], [1], [0, 0, 1, 1], [], []>} : vector<24x32xf32>, vector<32x16xf32>, vector<24x16xf32> -> vector<24x16xf32>
    %c0_6 = arith.constant 0 : index
    %c0_7 = arith.constant 0 : index
    %9 = vector.load %arg7[%c0_6, %c0_7] : memref<24x16xf32, #tpu.memory_space<vmem>>, vector<24x16xf32>
    %10 = arith.addf %9, %8 : vector<24x16xf32>
    %c0_8 = arith.constant 0 : index
    %c0_9 = arith.constant 0 : index
    %11 = vector.load %arg7[%c0_8, %c0_9] : memref<24x16xf32, #tpu.memory_space<vmem>>, vector<24x16xf32>
    tpu.vector_store %arg7[%c0_8, %c0_9], %10 {strides = array<i32>} : memref<24x16xf32, #tpu.memory_space<vmem>>, vector<24x16xf32>,
    %c0_10 = arith.constant 0 : index
    %c0_11 = arith.constant 0 : index
    %12 = vector.load %arg8[%c0_10, %c0_11] : memref<24x16xf32, #tpu.memory_space<vmem>>, vector<24x16xf32>
    %13 = arith.mulf %8, %8 : vector<24x16xf32>
    %14 = arith.addf %12, %13 : vector<24x16xf32>
    %c0_12 = arith.constant 0 : index
    %c0_13 = arith.constant 0 : index
    %15 = vector.load %arg8[%c0_12, %c0_13] : memref<24x16xf32, #tpu.memory_space<vmem>>, vector<24x16xf32>
    tpu.vector_store %arg8[%c0_12, %c0_13], %14 {strides = array<i32>} : memref<24x16xf32, #tpu.memory_space<vmem>>, vector<24x16xf32>,
    %c1_i32 = arith.constant 1 : i32
    %16 = arith.cmpi eq, %arg0, %c1_i32 : i32
    %c0_i32_14 = arith.constant 0 : i32
    %17 = arith.cmpi eq, %arg1, %c0_i32_14 : i32
    %18 = arith.andi %16, %17 : i1
    %19 = arith.extui %18 : i1 to i32
    %c0_i32_15 = arith.constant 0 : i32
    %20 = arith.cmpi ne, %19, %c0_i32_15 : i32
    scf.if %20 {
      %c0_16 = arith.constant 0 : index
      %c0_17 = arith.constant 0 : index
      %21 = vector.load %arg7[%c0_16, %c0_17] : memref<24x16xf32, #tpu.memory_space<vmem>>, vector<24x16xf32>
      %cst_18 = arith.constant dense<0.000000e+00> : vector<24xf32>
      %22 = vector.multi_reduction <add>, %21, %cst_18 [1] : vector<24x16xf32> to vector<24xf32>
      %23 = vector.shape_cast %22 : vector<24xf32> to vector<24x1xf32>
      %c0_19 = arith.constant 0 : index
      %c0_20 = arith.constant 0 : index
      %24 = vector.load %arg8[%c0_19, %c0_20] : memref<24x16xf32, #tpu.memory_space<vmem>>, vector<24x16xf32>
      %cst_21 = arith.constant dense<0.000000e+00> : vector<24xf32>
      %25 = vector.multi_reduction <add>, %24, %cst_21 [1] : vector<24x16xf32> to vector<24xf32>
      %26 = vector.shape_cast %25 : vector<24xf32> to vector<24x1xf32>
      %cst_22 = arith.constant 3.125000e-02 : f32
      %27 = vector.broadcast %cst_22 : f32 to vector<24x1xf32>
      %28 = arith.mulf %23, %27 : vector<24x1xf32>
      %cst_23 = arith.constant 3.125000e-02 : f32
      %29 = vector.broadcast %cst_23 : f32 to vector<24x1xf32>
      %30 = arith.mulf %26, %29 : vector<24x1xf32>
      %31 = arith.mulf %28, %28 : vector<24x1xf32>
      %32 = arith.subf %30, %31 : vector<24x1xf32>
      %cst_24 = arith.constant 0.000000e+00 : f32
      %33 = vector.broadcast %cst_24 : f32 to vector<24x1xf32>
      %34 = arith.maximumf %32, %33 : vector<24x1xf32>
      %cst_25 = arith.constant 9.99999974E-6 : f32
      %35 = vector.broadcast %cst_25 : f32 to vector<24x1xf32>
      %36 = arith.addf %34, %35 : vector<24x1xf32>
      %37 = math.rsqrt %36 : vector<24x1xf32>
      %c0_26 = arith.constant 0 : index
      %c0_27 = arith.constant 0 : index
      %38 = vector.load %arg4[%c0_26, %c0_27] : memref<24x1xf32, #tpu.memory_space<vmem>>, vector<24x1xf32>
      %39 = arith.mulf %38, %37 : vector<24x1xf32>
      %c0_28 = arith.constant 0 : index
      %c0_29 = arith.constant 0 : index
      %40 = vector.load %arg5[%c0_28, %c0_29] : memref<24x1xf32, #tpu.memory_space<vmem>>, vector<24x1xf32>
      %41 = arith.mulf %28, %39 : vector<24x1xf32>
      %42 = arith.subf %40, %41 : vector<24x1xf32>
      %c0_30 = arith.constant 0 : index
      %c0_31 = arith.constant 0 : index
      %43 = vector.load %arg6[%c0_30, %c0_31] : memref<24x2xf32, #tpu.memory_space<vmem>>, vector<24x1xf32>
      tpu.vector_store %arg6[%c0_30, %c0_31], %39 {strides = array<i32>} : memref<24x2xf32, #tpu.memory_space<vmem>>, vector<24x1xf32>,
      %c0_32 = arith.constant 0 : index
      %c1 = arith.constant 1 : index
      %44 = vector.load %arg6[%c0_32, %c1] : memref<24x2xf32, #tpu.memory_space<vmem>>, vector<24x1xf32>
      tpu.vector_store %arg6[%c0_32, %c1], %42 {strides = array<i32>} : memref<24x2xf32, #tpu.memory_space<vmem>>, vector<24x1xf32>,
    } else {
    }
    return
  }
  func.func @transform_0(%arg0: i32, %arg1: i32) -> (i32, i32, i32) {
    %c0_i32 = arith.constant 0 : i32
    %c0_i32_0 = arith.constant 0 : i32
    return %arg0, %c0_i32, %arg1 : i32, i32, i32
  }
  func.func @transform_1(%arg0: i32, %arg1: i32) -> (i32, i32) {
    %c0_i32 = arith.constant 0 : i32
    %c0_i32_0 = arith.constant 0 : i32
    %c0_i32_1 = arith.constant 0 : i32
    return %c0_i32, %c0_i32_0 : i32, i32
  }
  func.func @transform_2(%arg0: i32, %arg1: i32) -> (i32, i32) {
    %c0_i32 = arith.constant 0 : i32
    %c0_i32_0 = arith.constant 0 : i32
    %c0_i32_1 = arith.constant 0 : i32
    return %c0_i32, %c0_i32_0 : i32, i32
  }
  func.func @transform_3(%arg0: i32, %arg1: i32) -> (i32, i32) {
    %c0_i32 = arith.constant 0 : i32
    %c0_i32_0 = arith.constant 0 : i32
    %c0_i32_1 = arith.constant 0 : i32
    return %c0_i32, %c0_i32_0 : i32, i32
  }
  func.func @transform_4(%arg0: i32, %arg1: i32) -> (i32, i32) {
    %c0_i32 = arith.constant 0 : i32
    %c0_i32_0 = arith.constant 0 : i32
    %c0_i32_1 = arith.constant 0 : i32
    return %c0_i32, %c0_i32_0 : i32, i32
  }
}

</mosaic_0001>

<llo_original>
// kernel: conv_reg_block.3
$region0: #{conv_reg_block.3}
  #allocation0 [shape = 'u32[]', space=smem, size = 0x4, offset = 0x4, fixed_abs, tag = 'smem constant byte address 0x4 - core index']
  #allocation1 [shape = 'u32[72,128]{1,0:T(1,128)}', space=vmem, size = 0x9000, scoped, tag = 'internal scratch']
  %s0 = inlined_call_operand.vmem [shape: f32[2,32,16], index: 0, kind: input, shape index: {}]
  %s1 = inlined_call_operand.vmem [shape: f32[24,32], index: 1, kind: input, shape index: {}]
  %s2 = inlined_call_operand.vmem [shape: f32[24,2], index: 2, kind: input, shape index: {}]
  %s3 = inlined_call_operand.vmem [shape: f32[2,24,16], index: 3, kind: output, shape index: {}]
  %s4 = sld [smem:[#allocation0]]
  $region45: #{conv_reg_block.3} parent=0
    _
  %s6 = ssub.s32 1, %s4
  %s7 = scalar_select 0, %s6, %s4
  loop: start=0, step=1, limit=4
  $region2: #{conv_reg_block.3} parent=0 // loop_pre_header
    _
  $region3: #{conv_reg_block.3} parent=0 // loop_header
    %s9 = sphi 0, %s13
    %p10 = scmp.ge.s32.totalorder %s9, 4
    %s16 = sphi 0, %s28
    %s17 = sphi 0, %s24
    %s18 = sphi 0, %s16
    %s19 = sphi 0, %s17
    %s20 = sphi 0, %s18
    %s21 = sphi 0, %s19
    %s33 = sphi 0, %s35
    %s36 = sphi 0, %s33
    %s37 = sphi 0, %s36
    %s53 = sphi 0, %s37
    %s57 = sphi 0, %s57
    %s59 = sphi 0, %s57
    %s60 = sphi 0, %s59
    %s74 = sphi 0, %s60
    %s78 = sphi 0, %s78
    %s80 = sphi 0, %s78
    %s81 = sphi 0, %s80
    %s95 = sphi 0, %s81
    %s103 = sphi 0, %s105
    %s106 = sphi 0, %s103
    %s107 = sphi 0, %s106
    %s123 = sphi 0, %s107
  $region4: #{conv_reg_block.3} parent=0 // loop_header_branch
    %12 = sbr.rel (%p10) target = $region8
  $region5: #{conv_reg_block.3} parent=0 // loop_body
    %s14 = ssub.s32 %s9, 1
    %s15 = ssub.s32 %s9, 2
    %s22 = sadd.s32 1, %s17
    %p23 = scmp.ge.s32.totalorder %s22, 1
    %s24 = scalar_select %p23, 0, %s22
    %s25 = sadd.s32 1, %s16
    %s26 = scalar_select %p23, %s25, %s16
    %p27 = scmp.ge.s32.totalorder %s26, 2
    %s28 = scalar_select %p27, 0, %s26
    %s29 = ssub.s32 %s16, %s28
    %s30 = ssub.s32 %s17, %s24
    %s31 = sor.u32 %s29, %s30
    %p32 = scmp.eq.s32.totalorder %s31, 0
    %s34 = sadd.s32 %s33, 1
    %s35 = scalar_select %p32, %s33, %s34
    %p38 = pneg %p32
    %p39 = scmp.eq.s32.totalorder %s9, 1
    %p40 = por %p38, %p39
    %p41 = scmp.ne.s32.totalorder %s33, %s36
    %p42 = scmp.eq.s32.totalorder %s9, 0
    %p43 = por %p41, %p42
    %p44 = scmp.ne.s32.totalorder %s33, %s36
    %p45 = scmp.eq.s32.totalorder %s14, 1
    %p46 = por %p44, %p45
    %p47 = scmp.ne.s32.totalorder %s36, %s37
    %p48 = scmp.eq.s32.totalorder %s14, 0
    %p49 = por %p47, %p48
    %p50 = scmp.ne.s32.totalorder %s36, %s37
    %p51 = scmp.eq.s32.totalorder %s15, 1
    %p52 = por %p50, %p51
    %p54 = scmp.ne.s32.totalorder %s37, %s53
    %p55 = scmp.eq.s32.totalorder %s15, 0
    %p56 = por %p54, %p55
    %s58 = sadd.s32 %s57, 1
    %p61 = scmp.eq.s32.totalorder %s9, 1
    %p62 = scmp.ne.s32.totalorder %s57, %s59
    %p63 = scmp.eq.s32.totalorder %s9, 0
    %p64 = por %p62, %p63
    %p65 = scmp.ne.s32.totalorder %s57, %s59
    %p66 = scmp.eq.s32.totalorder %s14, 1
    %p67 = por %p65, %p66
    %p68 = scmp.ne.s32.totalorder %s59, %s60
    %p69 = scmp.eq.s32.totalorder %s14, 0
    %p70 = por %p68, %p69
    %p71 = scmp.ne.s32.totalorder %s59, %s60
    %p72 = scmp.eq.s32.totalorder %s15, 1
    %p73 = por %p71, %p72
    %p75 = scmp.ne.s32.totalorder %s60, %s74
    %p76 = scmp.eq.s32.totalorder %s15, 0
    %p77 = por %p75, %p76
    %s79 = sadd.s32 %s78, 1
    %p82 = scmp.eq.s32.totalorder %s9, 1
    %p83 = scmp.ne.s32.totalorder %s78, %s80
    %p84 = scmp.eq.s32.totalorder %s9, 0
    %p85 = por %p83, %p84
    %p86 = scmp.ne.s32.totalorder %s78, %s80
    %p87 = scmp.eq.s32.totalorder %s14, 1
    %p88 = por %p86, %p87
    %p89 = scmp.ne.s32.totalorder %s80, %s81
    %p90 = scmp.eq.s32.totalorder %s14, 0
    %p91 = por %p89, %p90
    %p92 = scmp.ne.s32.totalorder %s80, %s81
    %p93 = scmp.eq.s32.totalorder %s15, 1
    %p94 = por %p92, %p93
    %p96 = scmp.ne.s32.totalorder %s81, %s95
    %p97 = scmp.eq.s32.totalorder %s15, 0
    %p98 = por %p96, %p97
    %s99 = ssub.s32 %s16, %s28
    %s100 = ssub.s32 %s17, %s24
    %s101 = sor.u32 %s99, %s100
    %p102 = scmp.eq.s32.totalorder %s101, 0
    %s104 = sadd.s32 %s103, 1
    %s105 = scalar_select %p102, %s103, %s104
    %p108 = pneg %p102
    %p109 = scmp.eq.s32.totalorder %s9, 1
    %p110 = por %p108, %p109
    %p111 = scmp.ne.s32.totalorder %s103, %s106
    %p112 = scmp.eq.s32.totalorder %s9, 0
    %p113 = por %p111, %p112
    %p114 = scmp.ne.s32.totalorder %s103, %s106
    %p115 = scmp.eq.s32.totalorder %s14, 1
    %p116 = por %p114, %p115
    %p117 = scmp.ne.s32.totalorder %s106, %s107
    %p118 = scmp.eq.s32.totalorder %s14, 0
    %p119 = por %p117, %p118
    %p120 = scmp.ne.s32.totalorder %s106, %s107
    %p121 = scmp.eq.s32.totalorder %s15, 1
    %p122 = por %p120, %p121
    %p124 = scmp.ne.s32.totalorder %s107, %s123
    %p125 = scmp.eq.s32.totalorder %s15, 0
    %p126 = por %p124, %p125
    %p127 = scmp.le.s32.totalorder 1, %s9
    %p128 = scmp.lt.s32.totalorder %s9, 3
    %p129 = pnand %p127, %p128
    %p130 = pneg %p129
    // Predicated region
    $region9: #{conv_reg_block.3} parent=5 // pred_check
      _
    $region10: #{conv_reg_block.3} parent=5 // pred_check_branch
      %132 = sbr.rel (%p129) target = $region12
    $region11: #{conv_reg_block.3} parent=5 // pred_region
      %s133 = ssub.s32 %s9, 1
      // Predicated region
      $region13: #{conv_reg_block.3} parent=11 // pred_check
        %p134 = pneg %p70
      $region14: #{conv_reg_block.3} parent=11 // pred_check_branch
        %136 = sbr.rel (%p134) target = $region16
      $region15: #{conv_reg_block.3} parent=11 // pred_region
        _
      $region16: #{conv_reg_block.3} parent=11 // pred_fallthru
        _
      // Predicated region
      $region17: #{conv_reg_block.3} parent=11 // pred_check
        %p137 = pneg %p91
      $region18: #{conv_reg_block.3} parent=11 // pred_check_branch
        %139 = sbr.rel (%p137) target = $region20
      $region19: #{conv_reg_block.3} parent=11 // pred_region
        _
      $region20: #{conv_reg_block.3} parent=11 // pred_fallthru
        _
    $region12: #{conv_reg_block.3} parent=5 // pred_fallthru
      _
    %p140 = scmp.lt.s32.totalorder %s9, 2
    // Predicated region
    $region21: #{conv_reg_block.3} parent=5 // pred_check
      %p141 = pneg %p140
    $region22: #{conv_reg_block.3} parent=5 // pred_check_branch
      %143 = sbr.rel (%p141) target = $region24
    $region23: #{conv_reg_block.3} parent=5 // pred_region
      // Predicated region
      $region25: #{conv_reg_block.3} parent=23 // pred_check
        %p144 = pneg %p43
      $region26: #{conv_reg_block.3} parent=23 // pred_check_branch
        %146 = sbr.rel (%p144) target = $region28
      $region27: #{conv_reg_block.3} parent=23 // pred_region
        %p147 = scmp.lt.s32.totalorder %s16, 1
        %s148 = scalar_select %p147, %s16, 1
        %p149 = scmp.lt.s32.totalorder %s17, 0
        %s150 = scalar_select %p149, %s17, 0
        %s151 = smul.addr %s148, 4
        %s152 = sadd.s32 %s150, %s151
        %s153 = smul.addr %s152, 8
        %s154 = scalar_lea.vmem %s0, %s153
      $region28: #{conv_reg_block.3} parent=23 // pred_fallthru
        _
    $region24: #{conv_reg_block.3} parent=5 // pred_fallthru
      _
    %p155 = scmp.le.s32.totalorder 1, %s9
    %p156 = scmp.lt.s32.totalorder %s9, 3
    %p157 = pnand %p155, %p156
    %p158 = pneg %p157
    // Predicated region
    $region29: #{conv_reg_block.3} parent=5 // pred_check
      _
    $region30: #{conv_reg_block.3} parent=5 // pred_check_branch
      %160 = sbr.rel (%p157) target = $region32
    $region31: #{conv_reg_block.3} parent=5 // pred_region
      %s161 = ssub.s32 %s9, 1
      %p162 = scmp.lt.s32.totalorder %s18, 1
      %s163 = scalar_select %p162, %s18, 1
      %p164 = scmp.lt.s32.totalorder %s19, 0
      %s165 = scalar_select %p164, %s19, 0
      %s166 = smul.addr %s163, 4
      %s167 = sadd.s32 %s165, %s166
      %s168 = smul.addr %s167, 8
      %s169 = scalar_lea.vmem %s0, %s168
      %p170 = pneg %p49
      %p171 = pneg %p46
      %p172 = pneg %p70
      %p173 = pneg %p67
      %p174 = pneg %p91
      %p175 = pneg %p88
      %p176 = pneg %p119
      %p177 = pneg %p116
      %p178 = scmp.lt.s32.totalorder %s18, 1
      %s179 = scalar_select %p178, %s18, 1
      %p180 = scmp.lt.s32.totalorder %s19, 0
      %s181 = scalar_select %p180, %s19, 0
      %s182 = smul.addr %s179, 3
      %s183 = sadd.s32 %s181, %s182
      %s184 = smul.addr %s183, 8
      %s185 = scalar_lea.vmem %s3, %s184
      %p186 = scmp.lt.s32.totalorder %s18, 1
      %s187 = scalar_select %p186, %s18, 1
      %p188 = scmp.lt.s32.totalorder %s19, 0
      %s189 = scalar_select %p188, %s19, 0
      %s190 = smul.addr %s187, 4
      %s191 = sadd.s32 %s189, %s190
      %s192 = smul.addr %s191, 8
      %s193 = scalar_lea.vmem %s0, %s192
      %p194 = scmp.lt.s32.totalorder %s18, 1
      %s195 = scalar_select %p194, %s18, 1
      %p196 = scmp.lt.s32.totalorder %s19, 0
      %s197 = scalar_select %p196, %s19, 0
      %s198 = smul.addr %s195, 3
      %s199 = sadd.s32 %s197, %s198
      %s200 = smul.addr %s199, 8
      %s201 = scalar_lea.vmem %s3, %s200
      %v202 = vld [vmem:[%s1] sm:$0xff]
      %v203 = vld [vmem:[%s1 + $0x8] sm:$0xff]
      %v204 = vld [vmem:[%s1 + $0x10] sm:$0xff]
      %v205 = vld [vmem:[%s193] sm:$0xff]
      %v206 = vld [vmem:[%s193 + $0x8] sm:$0xff]
      %v207 = vld [vmem:[%s193 + $0x10] sm:$0xff]
      %v208 = vld [vmem:[%s193 + $0x18] sm:$0xff]
      %vm209 = vcmask 261120
      %v211 = vsel %vm209, %v202, 0
      %v214 = vsel %vm209, %v203, 0
      %v217 = vsel %vm209, %v204, 0
      %219 = vmatpush.msra.mxu0 0.0
      %220 = vmatpush.msra.mxu0 0.0
      %221 = vmatpush.msra.mxu0 0.0
      %222 = vmatpush.msra.mxu0 0.0
      %223 = vmatpush.msra.mxu0 0.0
      %224 = vmatpush.msra.mxu0 0.0
      %225 = vmatpush.msra.mxu0 0.0
      %226 = vmatpush.msra.mxu0 0.0
      %227 = vmatpush.msra.mxu0 0.0
      %228 = vmatpush.msra.mxu0 0.0
      %229 = vmatpush.msra.mxu0 0.0
      %230 = vmatpush.msra.mxu0 0.0
      %231 = vmatpush.msra.mxu0 %v208
      %232 = vmatpush.msra.mxu0 %v207
      %233 = vmatpush.msra.mxu0 %v206
      %234 = vmatpush.msra.mxu0 %v205
      %235 = vmatmul.f32.gmra.mxu0 %v211
      %v236 = vpop.f32.mrf.mxu0
      %v237 = vadd.f32 0.0, %v236
      %238 = vmatmul.f32.gmra.mxu0 %v214
      %v239 = vpop.f32.mrf.mxu0
      %v240 = vadd.f32 0.0, %v239
      %241 = vmatmul.f32.gmra.mxu0 %v217
      %v242 = vpop.f32.mrf.mxu0
      %v243 = vadd.f32 0.0, %v242
      %244 = vdwg.mxu0
      %v245 = vld [vmem:[%s2] sm:$0xff]
      %v246 = vld [vmem:[%s2 + $0x8] sm:$0xff]
      %v247 = vld [vmem:[%s2 + $0x10] sm:$0xff]
      %249 = vset.pattern.permute.xlu0 0
      %250 = vperm.xlu0 %249, %v245
      %v251 = vpop.permute.xlu0 %250
      %254 = vset.pattern.permute.xlu0 0
      %255 = vperm.xlu0 %254, %v246
      %v256 = vpop.permute.xlu0 %255
      %259 = vset.pattern.permute.xlu0 0
      %260 = vperm.xlu0 %259, %v247
      %v261 = vpop.permute.xlu0 %260
      %v263 = vmul.f32 %v237, %v251
      %v264 = vmul.f32 %v240, %v256
      %v265 = vmul.f32 %v243, %v261
      %266 = vset.pattern.permute.xlu0 1
      %267 = vperm.xlu0 %266, %v245
      %v268 = vpop.permute.xlu0 %267
      %270 = vset.pattern.permute.xlu0 1
      %271 = vperm.xlu0 %270, %v246
      %v272 = vpop.permute.xlu0 %271
      %274 = vset.pattern.permute.xlu0 1
      %275 = vperm.xlu0 %274, %v247
      %v276 = vpop.permute.xlu0 %275
      %v278 = vadd.f32 %v263, %v268
      %v279 = vadd.f32 %v264, %v272
      %v280 = vadd.f32 %v265, %v276
      %vm281 = vcmask 130048
      %282 = vst.msk [vmem:[%s201] sm:$0xff] %vm281, %v278
      %283 = vst.msk [vmem:[%s201 + $0x8] sm:$0xff] %vm281, %v279
      %284 = vst.msk [vmem:[%s201 + $0x10] sm:$0xff] %vm281, %v280
      %p285 = scmp.lt.s32.totalorder %s18, 1
      %s286 = scalar_select %p285, %s18, 1
      %p287 = scmp.lt.s32.totalorder %s19, 0
      %s288 = scalar_select %p287, %s19, 0
      %s289 = smul.addr %s286, 3
      %s290 = sadd.s32 %s288, %s289
      %s291 = smul.addr %s290, 8
      %s292 = scalar_lea.vmem %s3, %s291
      // Predicated region
      $region33: #{conv_reg_block.3} parent=31 // pred_check
        %p293 = pneg %p116
      $region34: #{conv_reg_block.3} parent=31 // pred_check_branch
        %295 = sbr.rel (%p293) target = $region36
      $region35: #{conv_reg_block.3} parent=31 // pred_region
        _
      $region36: #{conv_reg_block.3} parent=31 // pred_fallthru
        _
    $region32: #{conv_reg_block.3} parent=5 // pred_fallthru
      _
    %p296 = scmp.le.s32.totalorder 2, %s9
    // Predicated region
    $region37: #{conv_reg_block.3} parent=5 // pred_check
      %p297 = pneg %p296
    $region38: #{conv_reg_block.3} parent=5 // pred_check_branch
      %299 = sbr.rel (%p297) target = $region40
    $region39: #{conv_reg_block.3} parent=5 // pred_region
      %s300 = ssub.s32 %s9, 2
      // Predicated region
      $region41: #{conv_reg_block.3} parent=39 // pred_check
        %p301 = pneg %p122
      $region42: #{conv_reg_block.3} parent=39 // pred_check_branch
        %303 = sbr.rel (%p301) target = $region44
      $region43: #{conv_reg_block.3} parent=39 // pred_region
        %p304 = scmp.lt.s32.totalorder %s20, 1
        %s305 = scalar_select %p304, %s20, 1
        %p306 = scmp.lt.s32.totalorder %s21, 0
        %s307 = scalar_select %p306, %s21, 0
        %s308 = smul.addr %s305, 3
        %s309 = sadd.s32 %s307, %s308
        %s310 = smul.addr %s309, 8
        %s311 = scalar_lea.vmem %s3, %s310
      $region44: #{conv_reg_block.3} parent=39 // pred_fallthru
        _
    $region40: #{conv_reg_block.3} parent=5 // pred_fallthru
      _
  $region6: #{conv_reg_block.3} parent=0 // loop_footer
    %s13 = sadd.s32 1, %s9
  $region7: #{conv_reg_block.3} parent=0 // loop_footer_branch
    %8 = sbr.rel target = $region3
  $region8: #{conv_reg_block.3} parent=0 // loop_exit
    _

// kernel: conv_reg_block.2
$region0: #{conv_reg_block.2}
  #allocation0 [shape = 'u32[]', space=smem, size = 0x4, offset = 0x4, fixed_abs, tag = 'smem constant byte address 0x4 - core index']
  #allocation1 [shape = 'u32[72,128]{1,0:T(1,128)}', space=vmem, size = 0x9000, scoped, tag = 'internal scratch']
  #allocation2 [shape = 'f32[24,16]{1,0:T(8,128)}', space=vmem, size = 0x3000, scoped, tag = 'scratch operand']
  #allocation3 [shape = 'f32[24,16]{1,0:T(8,128)}', space=vmem, size = 0x3000, scoped, tag = 'scratch operand']
  %s0 = inlined_call_operand.vmem [shape: f32[2,32,16], index: 0, kind: input, shape index: {}]
  %s1 = inlined_call_operand.vmem [shape: f32[24,32], index: 1, kind: input, shape index: {}]
  %s2 = inlined_call_operand.vmem [shape: f32[24,1], index: 2, kind: input, shape index: {}]
  %s3 = inlined_call_operand.vmem [shape: f32[24,1], index: 3, kind: input, shape index: {}]
  %s4 = inlined_call_operand.vmem [shape: f32[24,2], index: 4, kind: output, shape index: {}]
  %s5 = sld [smem:[#allocation0]]
  $region57: #{conv_reg_block.2} parent=0
    _
  %s7 = ssub.s32 1, %s5
  %s8 = scalar_select 0, %s7, %s5
  loop: start=0, step=1, limit=4
  $region2: #{conv_reg_block.2} parent=0 // loop_pre_header
    _
  $region3: #{conv_reg_block.2} parent=0 // loop_header
    %s10 = sphi 0, %s14
    %p11 = scmp.ge.s32.totalorder %s10, 4
    %s17 = sphi 0, %s29
    %s18 = sphi 0, %s25
    %s19 = sphi 0, %s17
    %s20 = sphi 0, %s18
    %s21 = sphi 0, %s19
    %s22 = sphi 0, %s20
    %s34 = sphi 0, %s36
    %s37 = sphi 0, %s34
    %s38 = sphi 0, %s37
    %s54 = sphi 0, %s38
    %s58 = sphi 0, %s58
    %s60 = sphi 0, %s58
    %s61 = sphi 0, %s60
    %s75 = sphi 0, %s61
    %s79 = sphi 0, %s79
    %s81 = sphi 0, %s79
    %s82 = sphi 0, %s81
    %s96 = sphi 0, %s82
    %s100 = sphi 0, %s100
    %s102 = sphi 0, %s100
    %s103 = sphi 0, %s102
    %s117 = sphi 0, %s103
    %s121 = sphi 0, %s121
    %s123 = sphi 0, %s121
    %s124 = sphi 0, %s123
    %s138 = sphi 0, %s124
  $region4: #{conv_reg_block.2} parent=0 // loop_header_branch
    %13 = sbr.rel (%p11) target = $region8
  $region5: #{conv_reg_block.2} parent=0 // loop_body
    %s15 = ssub.s32 %s10, 1
    %s16 = ssub.s32 %s10, 2
    %s23 = sadd.s32 1, %s18
    %p24 = scmp.ge.s32.totalorder %s23, 1
    %s25 = scalar_select %p24, 0, %s23
    %s26 = sadd.s32 1, %s17
    %s27 = scalar_select %p24, %s26, %s17
    %p28 = scmp.ge.s32.totalorder %s27, 2
    %s29 = scalar_select %p28, 0, %s27
    %s30 = ssub.s32 %s17, %s29
    %s31 = ssub.s32 %s18, %s25
    %s32 = sor.u32 %s30, %s31
    %p33 = scmp.eq.s32.totalorder %s32, 0
    %s35 = sadd.s32 %s34, 1
    %s36 = scalar_select %p33, %s34, %s35
    %p39 = pneg %p33
    %p40 = scmp.eq.s32.totalorder %s10, 1
    %p41 = por %p39, %p40
    %p42 = scmp.ne.s32.totalorder %s34, %s37
    %p43 = scmp.eq.s32.totalorder %s10, 0
    %p44 = por %p42, %p43
    %p45 = scmp.ne.s32.totalorder %s34, %s37
    %p46 = scmp.eq.s32.totalorder %s15, 1
    %p47 = por %p45, %p46
    %p48 = scmp.ne.s32.totalorder %s37, %s38
    %p49 = scmp.eq.s32.totalorder %s15, 0
    %p50 = por %p48, %p49
    %p51 = scmp.ne.s32.totalorder %s37, %s38
    %p52 = scmp.eq.s32.totalorder %s16, 1
    %p53 = por %p51, %p52
    %p55 = scmp.ne.s32.totalorder %s38, %s54
    %p56 = scmp.eq.s32.totalorder %s16, 0
    %p57 = por %p55, %p56
    %s59 = sadd.s32 %s58, 1
    %p62 = scmp.eq.s32.totalorder %s10, 1
    %p63 = scmp.ne.s32.totalorder %s58, %s60
    %p64 = scmp.eq.s32.totalorder %s10, 0
    %p65 = por %p63, %p64
    %p66 = scmp.ne.s32.totalorder %s58, %s60
    %p67 = scmp.eq.s32.totalorder %s15, 1
    %p68 = por %p66, %p67
    %p69 = scmp.ne.s32.totalorder %s60, %s61
    %p70 = scmp.eq.s32.totalorder %s15, 0
    %p71 = por %p69, %p70
    %p72 = scmp.ne.s32.totalorder %s60, %s61
    %p73 = scmp.eq.s32.totalorder %s16, 1
    %p74 = por %p72, %p73
    %p76 = scmp.ne.s32.totalorder %s61, %s75
    %p77 = scmp.eq.s32.totalorder %s16, 0
    %p78 = por %p76, %p77
    %s80 = sadd.s32 %s79, 1
    %p83 = scmp.eq.s32.totalorder %s10, 1
    %p84 = scmp.ne.s32.totalorder %s79, %s81
    %p85 = scmp.eq.s32.totalorder %s10, 0
    %p86 = por %p84, %p85
    %p87 = scmp.ne.s32.totalorder %s79, %s81
    %p88 = scmp.eq.s32.totalorder %s15, 1
    %p89 = por %p87, %p88
    %p90 = scmp.ne.s32.totalorder %s81, %s82
    %p91 = scmp.eq.s32.totalorder %s15, 0
    %p92 = por %p90, %p91
    %p93 = scmp.ne.s32.totalorder %s81, %s82
    %p94 = scmp.eq.s32.totalorder %s16, 1
    %p95 = por %p93, %p94
    %p97 = scmp.ne.s32.totalorder %s82, %s96
    %p98 = scmp.eq.s32.totalorder %s16, 0
    %p99 = por %p97, %p98
    %s101 = sadd.s32 %s100, 1
    %p104 = scmp.eq.s32.totalorder %s10, 1
    %p105 = scmp.ne.s32.totalorder %s100, %s102
    %p106 = scmp.eq.s32.totalorder %s10, 0
    %p107 = por %p105, %p106
    %p108 = scmp.ne.s32.totalorder %s100, %s102
    %p109 = scmp.eq.s32.totalorder %s15, 1
    %p110 = por %p108, %p109
    %p111 = scmp.ne.s32.totalorder %s102, %s103
    %p112 = scmp.eq.s32.totalorder %s15, 0
    %p113 = por %p111, %p112
    %p114 = scmp.ne.s32.totalorder %s102, %s103
    %p115 = scmp.eq.s32.totalorder %s16, 1
    %p116 = por %p114, %p115
    %p118 = scmp.ne.s32.totalorder %s103, %s117
    %p119 = scmp.eq.s32.totalorder %s16, 0
    %p120 = por %p118, %p119
    %s122 = sadd.s32 %s121, 1
    %p125 = scmp.eq.s32.totalorder %s10, 1
    %p126 = scmp.ne.s32.totalorder %s121, %s123
    %p127 = scmp.eq.s32.totalorder %s10, 0
    %p128 = por %p126, %p127
    %p129 = scmp.ne.s32.totalorder %s121, %s123
    %p130 = scmp.eq.s32.totalorder %s15, 1
    %p131 = por %p129, %p130
    %p132 = scmp.ne.s32.totalorder %s123, %s124
    %p133 = scmp.eq.s32.totalorder %s15, 0
    %p134 = por %p132, %p133
    %p135 = scmp.ne.s32.totalorder %s123, %s124
    %p136 = scmp.eq.s32.totalorder %s16, 1
    %p137 = por %p135, %p136
    %p139 = scmp.ne.s32.totalorder %s124, %s138
    %p140 = scmp.eq.s32.totalorder %s16, 0
    %p141 = por %p139, %p140
    %p142 = scmp.le.s32.totalorder 1, %s10
    %p143 = scmp.lt.s32.totalorder %s10, 3
    %p144 = pnand %p142, %p143
    %p145 = pneg %p144
    // Predicated region
    $region9: #{conv_reg_block.2} parent=5 // pred_check
      _
    $region10: #{conv_reg_block.2} parent=5 // pred_check_branch
      %147 = sbr.rel (%p144) target = $region12
    $region11: #{conv_reg_block.2} parent=5 // pred_region
      %s148 = ssub.s32 %s10, 1
      // Predicated region
      $region13: #{conv_reg_block.2} parent=11 // pred_check
        %p149 = pneg %p71
      $region14: #{conv_reg_block.2} parent=11 // pred_check_branch
        %151 = sbr.rel (%p149) target = $region16
      $region15: #{conv_reg_block.2} parent=11 // pred_region
        _
      $region16: #{conv_reg_block.2} parent=11 // pred_fallthru
        _
      // Predicated region
      $region17: #{conv_reg_block.2} parent=11 // pred_check
        %p152 = pneg %p92
      $region18: #{conv_reg_block.2} parent=11 // pred_check_branch
        %154 = sbr.rel (%p152) target = $region20
      $region19: #{conv_reg_block.2} parent=11 // pred_region
        _
      $region20: #{conv_reg_block.2} parent=11 // pred_fallthru
        _
      // Predicated region
      $region21: #{conv_reg_block.2} parent=11 // pred_check
        %p155 = pneg %p113
      $region22: #{conv_reg_block.2} parent=11 // pred_check_branch
        %157 = sbr.rel (%p155) target = $region24
      $region23: #{conv_reg_block.2} parent=11 // pred_region
        _
      $region24: #{conv_reg_block.2} parent=11 // pred_fallthru
        _
    $region12: #{conv_reg_block.2} parent=5 // pred_fallthru
      _
    %p158 = scmp.lt.s32.totalorder %s10, 2
    // Predicated region
    $region25: #{conv_reg_block.2} parent=5 // pred_check
      %p159 = pneg %p158
    $region26: #{conv_reg_block.2} parent=5 // pred_check_branch
      %161 = sbr.rel (%p159) target = $region28
    $region27: #{conv_reg_block.2} parent=5 // pred_region
      // Predicated region
      $region29: #{conv_reg_block.2} parent=27 // pred_check
        %p162 = pneg %p44
      $region30: #{conv_reg_block.2} parent=27 // pred_check_branch
        %164 = sbr.rel (%p162) target = $region32
      $region31: #{conv_reg_block.2} parent=27 // pred_region
        %p165 = scmp.lt.s32.totalorder %s17, 1
        %s166 = scalar_select %p165, %s17, 1
        %p167 = scmp.lt.s32.totalorder %s18, 0
        %s168 = scalar_select %p167, %s18, 0
        %s169 = smul.addr %s166, 4
        %s170 = sadd.s32 %s168, %s169
        %s171 = smul.addr %s170, 8
        %s172 = scalar_lea.vmem %s0, %s171
      $region32: #{conv_reg_block.2} parent=27 // pred_fallthru
        _
    $region28: #{conv_reg_block.2} parent=5 // pred_fallthru
      _
    %p173 = scmp.le.s32.totalorder 1, %s10
    %p174 = scmp.lt.s32.totalorder %s10, 3
    %p175 = pnand %p173, %p174
    %p176 = pneg %p175
    // Predicated region
    $region33: #{conv_reg_block.2} parent=5 // pred_check
      _
    $region34: #{conv_reg_block.2} parent=5 // pred_check_branch
      %178 = sbr.rel (%p175) target = $region36
    $region35: #{conv_reg_block.2} parent=5 // pred_region
      %s179 = ssub.s32 %s10, 1
      %p180 = scmp.lt.s32.totalorder %s19, 1
      %s181 = scalar_select %p180, %s19, 1
      %p182 = scmp.lt.s32.totalorder %s20, 0
      %s183 = scalar_select %p182, %s20, 0
      %s184 = smul.addr %s181, 4
      %s185 = sadd.s32 %s183, %s184
      %s186 = smul.addr %s185, 8
      %s187 = scalar_lea.vmem %s0, %s186
      %p188 = pneg %p50
      %p189 = pneg %p47
      %p190 = pneg %p71
      %p191 = pneg %p68
      %p192 = pneg %p92
      %p193 = pneg %p89
      %p194 = pneg %p113
      %p195 = pneg %p110
      %p196 = pneg %p134
      %p197 = pneg %p131
      %p198 = scmp.lt.s32.totalorder %s19, 1
      %s199 = scalar_select %p198, %s19, 1
      %p200 = scmp.lt.s32.totalorder %s20, 0
      %s201 = scalar_select %p200, %s20, 0
      %s202 = smul.addr %s199, 4
      %s203 = sadd.s32 %s201, %s202
      %s204 = smul.addr %s203, 8
      %s205 = scalar_lea.vmem %s0, %s204
      %p206 = scmp.eq.s32.totalorder %s19, 0
      %p207 = scmp.eq.s32.totalorder %s20, 0
      %p208 = pnand %p206, %p207
      %p209 = pneg %p208
      // Predicated region
      $region37: #{conv_reg_block.2} parent=35 // pred_check
        _
      $region38: #{conv_reg_block.2} parent=35 // pred_check_branch
        %211 = sbr.rel (%p208) target = $region40
      $region39: #{conv_reg_block.2} parent=35 // pred_region
        %vm212 = vcmask 130048
        %213 = vst.msk [vmem:[#allocation2] sm:$0xff] %vm212, 0.0
        %214 = vst.msk [vmem:[#allocation2 + $0x8] sm:$0xff] %vm212, 0.0
        %215 = vst.msk [vmem:[#allocation2 + $0x10] sm:$0xff] %vm212, 0.0
        %216 = vst.msk [vmem:[#allocation3] sm:$0xff] %vm212, 0.0
        %217 = vst.msk [vmem:[#allocation3 + $0x8] sm:$0xff] %vm212, 0.0
        %218 = vst.msk [vmem:[#allocation3 + $0x10] sm:$0xff] %vm212, 0.0
      $region40: #{conv_reg_block.2} parent=35 // pred_fallthru
        _
      %v219 = vld [vmem:[%s1] sm:$0xff]
      %v220 = vld [vmem:[%s1 + $0x8] sm:$0xff]
      %v221 = vld [vmem:[%s1 + $0x10] sm:$0xff]
      %v222 = vld [vmem:[%s205] sm:$0xff]
      %v223 = vld [vmem:[%s205 + $0x8] sm:$0xff]
      %v224 = vld [vmem:[%s205 + $0x10] sm:$0xff]
      %v225 = vld [vmem:[%s205 + $0x18] sm:$0xff]
      %vm226 = vcmask 261120
      %v228 = vsel %vm226, %v219, 0
      %v231 = vsel %vm226, %v220, 0
      %v234 = vsel %vm226, %v221, 0
      %236 = vmatpush.msra.mxu0 0.0
      %237 = vmatpush.msra.mxu0 0.0
      %238 = vmatpush.msra.mxu0 0.0
      %239 = vmatpush.msra.mxu0 0.0
      %240 = vmatpush.msra.mxu0 0.0
      %241 = vmatpush.msra.mxu0 0.0
      %242 = vmatpush.msra.mxu0 0.0
      %243 = vmatpush.msra.mxu0 0.0
      %244 = vmatpush.msra.mxu0 0.0
      %245 = vmatpush.msra.mxu0 0.0
      %246 = vmatpush.msra.mxu0 0.0
      %247 = vmatpush.msra.mxu0 0.0
      %248 = vmatpush.msra.mxu0 %v225
      %249 = vmatpush.msra.mxu0 %v224
      %250 = vmatpush.msra.mxu0 %v223
      %251 = vmatpush.msra.mxu0 %v222
      %252 = vmatmul.f32.gmra.mxu0 %v228
      %v253 = vpop.f32.mrf.mxu0
      %v254 = vadd.f32 0.0, %v253
      %255 = vmatmul.f32.gmra.mxu0 %v231
      %v256 = vpop.f32.mrf.mxu0
      %v257 = vadd.f32 0.0, %v256
      %258 = vmatmul.f32.gmra.mxu0 %v234
      %v259 = vpop.f32.mrf.mxu0
      %v260 = vadd.f32 0.0, %v259
      %261 = vdwg.mxu0
      %v262 = vld [vmem:[#allocation2] sm:$0xff]
      %v263 = vld [vmem:[#allocation2 + $0x8] sm:$0xff]
      %v264 = vld [vmem:[#allocation2 + $0x10] sm:$0xff]
      %v265 = vadd.f32 %v262, %v254
      %v266 = vadd.f32 %v263, %v257
      %v267 = vadd.f32 %v264, %v260
      %vm268 = vcmask 130048
      %269 = vst.msk [vmem:[#allocation2] sm:$0xff] %vm268, %v265
      %270 = vst.msk [vmem:[#allocation2 + $0x8] sm:$0xff] %vm268, %v266
      %271 = vst.msk [vmem:[#allocation2 + $0x10] sm:$0xff] %vm268, %v267
      %v272 = vld [vmem:[#allocation3] sm:$0xff]
      %v273 = vld [vmem:[#allocation3 + $0x8] sm:$0xff]
      %v274 = vld [vmem:[#allocation3 + $0x10] sm:$0xff]
      %v275 = vmul.f32 %v254, %v254
      %v276 = vmul.f32 %v257, %v257
      %v277 = vmul.f32 %v260, %v260
      %v278 = vadd.f32 %v272, %v275
      %v279 = vadd.f32 %v273, %v276
      %v280 = vadd.f32 %v274, %v277
      %281 = vst.msk [vmem:[#allocation3] sm:$0xff] %vm268, %v278
      %282 = vst.msk [vmem:[#allocation3 + $0x8] sm:$0xff] %vm268, %v279
      %283 = vst.msk [vmem:[#allocation3 + $0x10] sm:$0xff] %vm268, %v280
      %p284 = scmp.eq.s32.totalorder %s19, 1
      %p285 = pnand %p284, %p207
      %p286 = pneg %p285
      // Predicated region
      $region41: #{conv_reg_block.2} parent=35 // pred_check
        _
      $region42: #{conv_reg_block.2} parent=35 // pred_check_branch
        %288 = sbr.rel (%p285) target = $region44
      $region43: #{conv_reg_block.2} parent=35 // pred_region
        %v289 = vld [vmem:[#allocation2] sm:$0xff]
        %v290 = vld [vmem:[#allocation2 + $0x8] sm:$0xff]
        %v291 = vld [vmem:[#allocation2 + $0x10] sm:$0xff]
        %v292 = vsel %vm268, %v289, 0.0
        %293 = vadd.xlane.f32.xlu0 %v292
        %v294 = vpop.xlane.xlu0 %293
        %v295 = vsel %vm268, %v290, 0.0
        %296 = vadd.xlane.f32.xlu0 %v295
        %v297 = vpop.xlane.xlu0 %296
        %v298 = vsel %vm268, %v291, 0.0
        %299 = vadd.xlane.f32.xlu0 %v298
        %v300 = vpop.xlane.xlu0 %299
        %v301 = vld [vmem:[#allocation3] sm:$0xff]
        %v302 = vld [vmem:[#allocation3 + $0x8] sm:$0xff]
        %v303 = vld [vmem:[#allocation3 + $0x10] sm:$0xff]
        %v304 = vsel %vm268, %v301, 0.0
        %305 = vadd.xlane.f32.xlu0 %v304
        %v306 = vpop.xlane.xlu0 %305
        %v307 = vsel %vm268, %v302, 0.0
        %308 = vadd.xlane.f32.xlu0 %v307
        %v309 = vpop.xlane.xlu0 %308
        %v310 = vsel %vm268, %v303, 0.0
        %311 = vadd.xlane.f32.xlu0 %v310
        %v312 = vpop.xlane.xlu0 %311
        %v313 = vmul.f32 %v294, 0.03125
        %v314 = vmul.f32 %v297, 0.03125
        %v315 = vmul.f32 %v300, 0.03125
        %v316 = vmul.f32 %v306, 0.03125
        %v317 = vmul.f32 %v309, 0.03125
        %v318 = vmul.f32 %v312, 0.03125
        %v319 = vmul.f32 %v313, %v313
        %v320 = vmul.f32 %v314, %v314
        %v321 = vmul.f32 %v315, %v315
        %v322 = vsub.f32 %v316, %v319
        %v323 = vsub.f32 %v317, %v320
        %v324 = vsub.f32 %v318, %v321
        %v325 = vmax.f32 %v322, 0.0
        %v326 = vmax.f32 %v323, 0.0
        %v327 = vmax.f32 %v324, 0.0
        %v328 = vadd.f32 %v325, 1e-05
        %v329 = vadd.f32 %v326, 1e-05
        %v330 = vadd.f32 %v327, 1e-05
        %v331 = vrsqrt.pop %v328
        %v332 = vmul.f32 %v331, %v328
        %v333 = vmul.f32 %v332, %v331
        %v334 = vmul.f32 0.5, %v333
        %v335 = vsub.f32 1.5, %v334
        %v336 = vmul.f32 %v331, %v335
        %vm337 = vweird.f32 %v328
        %vm338 = vweird.f32 %v331
        %vm339 = vmor %vm337, %vm338
        %v340 = vsel %vm339, %v331, %v336
        %v341 = vrsqrt.pop %v329
        %v342 = vmul.f32 %v341, %v329
        %v343 = vmul.f32 %v342, %v341
        %v344 = vmul.f32 0.5, %v343
        %v345 = vsub.f32 1.5, %v344
        %v346 = vmul.f32 %v341, %v345
        %vm347 = vweird.f32 %v329
        %vm348 = vweird.f32 %v341
        %vm349 = vmor %vm347, %vm348
        %v350 = vsel %vm349, %v341, %v346
        %v351 = vrsqrt.pop %v330
        %v352 = vmul.f32 %v351, %v330
        %v353 = vmul.f32 %v352, %v351
        %v354 = vmul.f32 0.5, %v353
        %v355 = vsub.f32 1.5, %v354
        %v356 = vmul.f32 %v351, %v355
        %vm357 = vweird.f32 %v330
        %vm358 = vweird.f32 %v351
        %vm359 = vmor %vm357, %vm358
        %v360 = vsel %vm359, %v351, %v356
        %v361 = vld [vmem:[%s2] sm:$0xff]
        %v362 = vld [vmem:[%s2 + $0x8] sm:$0xff]
        %v363 = vld [vmem:[%s2 + $0x10] sm:$0xff]
        %v364 = vmul.f32 %v361, %v340
        %v365 = vmul.f32 %v362, %v350
        %v366 = vmul.f32 %v363, %v360
        %v367 = vld [vmem:[%s3] sm:$0xff]
        %v368 = vld [vmem:[%s3 + $0x8] sm:$0xff]
        %v369 = vld [vmem:[%s3 + $0x10] sm:$0xff]
        %v370 = vmul.f32 %v313, %v364
        %v371 = vmul.f32 %v314, %v365
        %v372 = vmul.f32 %v315, %v366
        %v373 = vsub.f32 %v367, %v370
        %v374 = vsub.f32 %v368, %v371
        %v375 = vsub.f32 %v369, %v372
        %vm376 = vcmask 7168
        %377 = vst.msk [vmem:[%s4] sm:$0xff] %vm376, %v364
        %378 = vst.msk [vmem:[%s4 + $0x8] sm:$0xff] %vm376, %v365
        %379 = vst.msk [vmem:[%s4 + $0x10] sm:$0xff] %vm376, %v366
        %383 = vrot.lane.b32.xlu0 %v373, 1
        %v384 = vpop.permute.xlu0 %383
        %385 = vrot.lane.b32.xlu0 %v374, 1
        %v386 = vpop.permute.xlu0 %385
        %387 = vrot.lane.b32.xlu0 %v375, 1
        %v388 = vpop.permute.xlu0 %387
        %vm392 = vcmask 15368
        %393 = vst.msk [vmem:[%s4] sm:$0xff] %vm392, %v384
        %394 = vst.msk [vmem:[%s4 + $0x8] sm:$0xff] %vm392, %v386
        %395 = vst.msk [vmem:[%s4 + $0x10] sm:$0xff] %vm392, %v388
      $region44: #{conv_reg_block.2} parent=35 // pred_fallthru
        _
      // Predicated region
      $region45: #{conv_reg_block.2} parent=35 // pred_check
        %p396 = pneg %p131
      $region46: #{conv_reg_block.2} parent=35 // pred_check_branch
        %398 = sbr.rel (%p396) target = $region48
      $region47: #{conv_reg_block.2} parent=35 // pred_region
        _
      $region48: #{conv_reg_block.2} parent=35 // pred_fallthru
        _
      // Predicated region
      $region49: #{conv_reg_block.2} parent=35 // pred_check
        %p399 = pneg %p131
      $region50: #{conv_reg_block.2} parent=35 // pred_check_branch
        %401 = sbr.rel (%p399) target = $region52
      $region51: #{conv_reg_block.2} parent=35 // pred_region
        _
      $region52: #{conv_reg_block.2} parent=35 // pred_fallthru
        _
    $region36: #{conv_reg_block.2} parent=5 // pred_fallthru
      _
    %p402 = scmp.le.s32.totalorder 2, %s10
    // Predicated region
    $region53: #{conv_reg_block.2} parent=5 // pred_check
      %p403 = pneg %p402
    $region54: #{conv_reg_block.2} parent=5 // pred_check_branch
      %405 = sbr.rel (%p403) target = $region56
    $region55: #{conv_reg_block.2} parent=5 // pred_region
      %s406 = ssub.s32 %s10, 2
    $region56: #{conv_reg_block.2} parent=5 // pred_fallthru
      _
  $region6: #{conv_reg_block.2} parent=0 // loop_footer
    %s14 = sadd.s32 1, %s10
  $region7: #{conv_reg_block.2} parent=0 // loop_footer_branch
    %9 = sbr.rel target = $region3
  $region8: #{conv_reg_block.2} parent=0 // loop_exit
    _

</llo_original>
